<compile_context>
chip_gen: v5e
topology: v5e:2x2
jax: 0.10.0
libtpu: 0.0.40
codegen_flags: <defaults>
</compile_context>

<pallas_src>
import functools

import jax
import jax.numpy as jnp
from jax import lax
from jax.experimental import pallas as pl
from jax.experimental.pallas import tpu as pltpu


def _round_up(n: int, m: int) -> int:
    return ((n + m - 1) // m) * m


def _use_qkt_path(S: int, Kd: int, Vd: int, mxu: int = 128) -> bool:
    """MXU-pass-count heuristic: prefer the QK^T (SxS) path unless reassociation saves passes."""
    if Kd <= 32 and Vd <= 32 and S <= 256:
        return True
    cm = lambda n: -(-n // mxu)
    qkt = cm(S) * cm(S) * cm(Kd) + cm(S) * cm(Vd) * cm(S)          # scores + scores@V
    rea = cm(Kd) * cm(Vd) * cm(S) + cm(S) * cm(Vd) * cm(Kd)        # K^T V   + Q@(K^T V)
    return qkt <= rea


def _pick_bt(B: int, Sp: int, Dp: int, itemsize: int,
             budget_bytes: int, target_rows: int, max_bt: int) -> int:
    """Largest divisor of B (<= max_bt) whose activation block fits the budget."""
    best = 1
    limit = max(1, min(B, max_bt))
    for cand in range(1, limit + 1):
        if B % cand:
            continue
        if cand * Sp * Dp * itemsize > budget_bytes:
            break
        best = cand
        if cand * Sp >= target_rows:
            break
    return best


def _lsa_fused_kernel(x_ref, wqkv_ref, wp_ref, o_ref, *scratch,
                      kd, vd, use_qkt, compute_dtype, weights_resident, acc_is_out):
    """One (batch-block, layer) grid step of the fused LSA stack."""
    acc_ref = o_ref if acc_is_out else scratch[0]
    l = pl.program_id(1)
    num_layers = pl.num_programs(1)

    # Layer 0: pull this batch block into the resident residual-stream buffer.
    @pl.when(l == 0)
    def _():
        acc_ref[...] = x_ref[...].astype(acc_ref.dtype)

    x = acc_ref[...].astype(jnp.float32)          # (Bt, Sp, Dp) exact f32 residual stream
    bt, s, dp = x.shape

    if weights_resident:                          # full (L, ...) weights live in VMEM
        wqkv = wqkv_ref[l]                        # (Dp, Wc)
        wp = wp_ref[l]                            # (Vd, Dp)
    else:                                         # per-layer block DMA'd by the pipeline
        wqkv = wqkv_ref[0]
        wp = wp_ref[0]

    cdt = compute_dtype

    # Single wide lane-dense projection: QKV in one flattened (Bt*Sp, Dp) @ (Dp, Wc) matmul.
    x2 = x.reshape(bt * s, dp).astype(cdt)
    qkv = jnp.dot(x2, wqkv.astype(cdt), preferred_element_type=jnp.float32)   # (Bt*Sp, Wc)
    q = qkv[:, :kd].reshape(bt, s, kd).astype(cdt)
    k = qkv[:, kd:2 * kd].reshape(bt, s, kd).astype(cdt)
    v = qkv[:, 2 * kd:2 * kd + vd].reshape(bt, s, vd).astype(cdt)

    if use_qkt:
        # scores = Q K^T (contract last dims, no explicit transpose), then scores @ V.
        scores = lax.dot_general(q, k, (((2,), (2,)), ((0,), (0,))),
                                 preferred_element_type=jnp.float32)          # (Bt, Sp, Sp)
        ctx = lax.dot_general(scores.astype(cdt), v, (((2,), (1,)), ((0,), (0,))),
                              preferred_element_type=jnp.float32)             # (Bt, Sp, Vd)
    else:
        # No softmax -> reassociate: context = Q @ (K^T V); no SxS intermediate.
        kv = lax.dot_general(k, v, (((1,), (1,)), ((0,), (0,))),
                             preferred_element_type=jnp.float32)              # (Bt, Kd, Vd)
        ctx = lax.dot_general(q, kv.astype(cdt), (((2,), (1,)), ((0,), (0,))),
                              preferred_element_type=jnp.float32)             # (Bt, Sp, Vd)

    proj = jnp.dot(ctx.reshape(bt * s, vd).astype(cdt), wp.astype(cdt),
                   preferred_element_type=jnp.float32)                        # (Bt*Sp, Dp)
    acc_ref[...] = (x + proj.reshape(bt, s, dp)).astype(acc_ref.dtype)        # residual add

    if not acc_is_out:
        @pl.when(l == num_layers - 1)
        def _():
            o_ref[...] = acc_ref[...].astype(o_ref.dtype)


@functools.partial(jax.jit, static_argnames=("compute_dtype",))
def lsa_model_forward(x, params, compute_dtype=jnp.bfloat16):
    """Fused LSA_Model forward.

    x: (B, S, D); params: list of dicts with (in_dim, out_dim) weights
    (i.e. PyTorch nn.Linear weight, transposed).  compute_dtype is the MXU operand dtype
    (accumulation is always f32 and the residual stream is kept exactly in f32).
    """
    num_layers = len(params)
    B, S, D = x.shape
    Kd = params[0]["wq"].shape[1]
    Vd = params[0]["wv"].shape[1]
    for p in params:  # residual add forces a uniform feature dim -> stacking is safe
        assert p["wq"].shape == (D, Kd) and p["wk"].shape == (D, Kd)
        assert p["wv"].shape == (D, Vd) and p["wp"].shape == (Vd, D)

    wq = jnp.stack([p["wq"] for p in params])      # (L, D, Kd)
    wk = jnp.stack([p["wk"] for p in params])      # (L, D, Kd)
    wv = jnp.stack([p["wv"] for p in params])      # (L, D, Vd)
    wp = jnp.stack([p["wp"] for p in params])      # (L, Vd, D)

    # One concatenated QKV weight; pad its output dim to a multiple of 128 (lane-dense).
    wqkv = jnp.concatenate([wq, wk, wv], axis=2)   # (L, D, 2*Kd + Vd)
    Wc = _round_up(2 * Kd + Vd, 128)
    if Wc != 2 * Kd + Vd:
        wqkv = jnp.pad(wqkv, ((0, 0), (0, 0), (0, Wc - (2 * Kd + Vd))))

    # Lane-dense feature dim (pad D -> Dp) and tile-aligned sequence (pad S -> Sp).
    # Zero padding is exact: padded rows/cols stay zero through every layer.
    Dp = _round_up(D, 128)
    Sp = _round_up(S, 8)
    if Dp != D:
        x = jnp.pad(x, ((0, 0), (0, 0), (0, Dp - D)))
        wqkv = jnp.pad(wqkv, ((0, 0), (0, Dp - D), (0, 0)))
        wp = jnp.pad(wp, ((0, 0), (0, 0), (0, Dp - D)))
    if Sp != S:
        x = jnp.pad(x, ((0, 0), (0, Sp - S), (0, 0)))

    x_item = jnp.dtype(x.dtype).itemsize
    w_item = jnp.dtype(wqkv.dtype).itemsize
    c_item = jnp.dtype(compute_dtype).itemsize

    # Hardware-aware budgets (conservative fallback = v7x-sized 64 MiB VMEM per core).
    try:
        vmem_cap = int(pltpu.get_tpu_info().vmem_capacity_bytes)
    except Exception:
        vmem_cap = 64 << 20
    small_vmem = vmem_cap <= (64 << 20)
    blk_budget = (4 << 20) if small_vmem else (8 << 20)
    target_rows = 256 if small_vmem else 512
    vmem_cap_req = max(32 << 20, min(vmem_cap - (12 << 20), 112 << 20))

    # Keep >= 2 batch blocks when possible so the "parallel" axis can shard over v7x's 2 TCs.
    max_bt = B // 2 if B >= 2 else 1
    Bt = _pick_bt(B, Sp, Dp, x_item, blk_budget, target_rows, max_bt)
    nb = B // Bt

    use_qkt = _use_qkt_path(Sp, Kd, Vd)
    acc_is_out = (x.dtype == jnp.float32)          # accumulate residual directly in o_ref

    # Resident weights when the whole stack fits a small VMEM budget.
    w_bytes = num_layers * (Dp * Wc + Vd * Dp) * w_item
    weights_resident = w_bytes <= ((8 << 20) if small_vmem else (16 << 20))
    if weights_resident:
        wqkv_spec = pl.BlockSpec((num_layers, Dp, Wc), lambda b, l: (0, 0, 0))
        wp_spec = pl.BlockSpec((num_layers, Vd, Dp), lambda b, l: (0, 0, 0))
    else:
        wqkv_spec = pl.BlockSpec((1, Dp, Wc), lambda b, l: (l, 0, 0))
        wp_spec = pl.BlockSpec((1, Vd, Dp), lambda b, l: (l, 0, 0))

    scratch_shapes = [] if acc_is_out else [pltpu.VMEM((Bt, Sp, Dp), jnp.float32)]

    # VMEM estimate including the previously-missing intermediates (x2, qkv, ctx, proj).
    act = Bt * Sp * Dp
    est = 2 * act * x_item                         # input block, double-buffered
    est += 2 * act * x_item                        # output block, double-buffered
    if not acc_is_out:
        est += act * 4                             # f32 residual scratch
    est += w_bytes if weights_resident else 2 * (Dp * Wc + Vd * Dp) * w_item
    est += act * 4                                 # x as f32
    est += act * c_item                            # x2 cast
    est += Bt * Sp * Wc * (4 + c_item)             # qkv (f32) + q/k/v casts
    est += (Bt * Sp * Sp if use_qkt else Bt * Kd * Vd) * (4 + c_item)   # scores / K^T V
    est += Bt * Sp * Vd * (4 + c_item)             # ctx
    est += act * 4                                 # proj
    vmem_limit = int(min(vmem_cap_req, max(32 << 20, int(1.5 * est))))

    kernel = functools.partial(
        _lsa_fused_kernel,
        kd=Kd, vd=Vd, use_qkt=use_qkt, compute_dtype=compute_dtype,
        weights_resident=weights_resident, acc_is_out=acc_is_out)

    out = pl.pallas_call(
        kernel,
        out_shape=jax.ShapeDtypeStruct((B, Sp, Dp), x.dtype),
        grid_spec=pltpu.PrefetchScalarGridSpec(
            num_scalar_prefetch=0,
            grid=(nb, num_layers),
            in_specs=[
                pl.BlockSpec((Bt, Sp, Dp), lambda b, l: (b, 0, 0)),
                wqkv_spec,
                wp_spec,
            ],
            out_specs=pl.BlockSpec((Bt, Sp, Dp), lambda b, l: (b, 0, 0)),
            scratch_shapes=scratch_shapes,
        ),
        compiler_params=pltpu.CompilerParams(
            dimension_semantics=("parallel", "arbitrary"),
            vmem_limit_bytes=vmem_limit,
        ),
    )(x, wqkv, wp)

    if Sp != S or Dp != D:
        out = out[:, :S, :D]
    return out


def _trunc_normal(key, shape, std, dtype=jnp.float32):
    # Haiku-style truncated normal in (-2*std, 2*std)  (the module's init uses std=0.002).
    return std * jax.random.truncated_normal(key, -2.0, 2.0, shape, dtype)


def init_lsa_model_params(key, num_layers, input_dim, output_dim, key_dim,
                          value_dim, hidden_dim=None, std=0.002):
    """Parameter init mirroring LSA_Model.__init__; weights stored as (in_dim, out_dim)."""
    if num_layers == 1:
        dims = [(input_dim, output_dim)]
    else:
        dims = [(input_dim, hidden_dim)]
        dims += [(hidden_dim, hidden_dim)] * (num_layers - 2)
        dims += [(hidden_dim, output_dim)]

    params = []
    for (din, dout) in dims:
        key, kq, kk, kv, kp = jax.random.split(key, 5)
        params.append(dict(
            wq=_trunc_normal(kq, (din, key_dim), std),
            wk=_trunc_normal(kk, (din, key_dim), std),
            wv=_trunc_normal(kv, (din, value_dim), std),
            wp=_trunc_normal(kp, (value_dim, dout), std),
        ))
    return params


def _reference_forward(x, params):
    hp = lax.Precision.HIGHEST
    out = x
    for p in params:
        q = jnp.einsum("bsd,dk->bsk", out, p["wq"], precision=hp)
        k = jnp.einsum("bsd,dk->bsk", out, p["wk"], precision=hp)
        v = jnp.einsum("bsd,dv->bsv", out, p["wv"], precision=hp)
        scores = jnp.einsum("bqk,bsk->bqs", q, k, precision=hp)
        ctx = jnp.einsum("bqs,bsv->bqv", scores, v, precision=hp)
        out = out + jnp.einsum("bqv,vd->bqd", ctx, p["wp"], precision=hp)
    return out


def _run_case(key, B, S, D, Kd, Vd, L, std, compute_dtype, atol, rtol):
    kx, kp = jax.random.split(key)
    x = jax.random.normal(kx, (B, S, D), dtype=jnp.float32)
    params = init_lsa_model_params(kp, L, D, D, Kd, Vd, hidden_dim=D, std=std)
    out = jax.block_until_ready(lsa_model_forward(x, params, compute_dtype=compute_dtype))
    ref = _reference_forward(x, params)
    assert out.shape == (B, S, D)
    err = float(jnp.max(jnp.abs(out - ref)))
    assert jnp.allclose(out, ref, atol=atol, rtol=rtol), f"max abs err {err}"


if __name__ == "__main__":
    key = jax.random.PRNGKey(0)
    k1, k2, k3 = jax.random.split(key, 3)

    # Case 1: tiny shapes, f32 compute path, tight tolerance.
    _run_case(k1, B=2, S=8, D=32, Kd=16, Vd=16, L=2, std=0.02,
              compute_dtype=jnp.float32, atol=1e-4, rtol=1e-4)

    # Case 2: longer sequence, 3 layers, default bf16-operand / f32-accumulate fast path.
    _run_case(k2, B=2, S=64, D=32, Kd=8, Vd=8, L=3, std=0.02,
              compute_dtype=jnp.bfloat16, atol=5e-4, rtol=5e-4)

    # Case 3: non-multiple-of-8 sequence length (exercises S padding), f32 compute.
    _run_case(k3, B=2, S=12, D=32, Kd=8, Vd=16, L=2, std=0.02,
              compute_dtype=jnp.float32, atol=1e-4, rtol=1e-4)

    print("KERNEL_OK")
</pallas_src>

<mosaic_0001>
module attributes {stable_mosaic.version = 11 : i64} {
  func.func @_lsa_fused_kernel(%arg0: i32, %arg1: i32, %arg2: memref<1x8x128xf32, #tpu.memory_space<vmem>>, %arg3: memref<2x128x128xf32, #tpu.memory_space<vmem>>, %arg4: memref<2x16x128xf32, #tpu.memory_space<vmem>>, %arg5: memref<1x8x128xf32, #tpu.memory_space<vmem>>) attributes {dimension_semantics = [#tpu.dimension_semantics<parallel>, #tpu.dimension_semantics<arbitrary>], iteration_bounds = array<i64: 2, 2>, scalar_prefetch = 0 : i64, scratch_operands = 0 : i64, tpu.core_type = #tpu.core_type<tc>, window_params = [{transform_indices = @transform_0, window_bounds = array<i64: 1, 8, 128>}, {pipeline_mode = #tpu.pipeline_mode<synchronous>, transform_indices = @transform_1, window_bounds = array<i64: 2, 128, 128>}, {pipeline_mode = #tpu.pipeline_mode<synchronous>, transform_indices = @transform_2, window_bounds = array<i64: 2, 16, 128>}, {transform_indices = @transform_3, window_bounds = array<i64: 1, 8, 128>}]} {
    %c0_i32 = arith.constant 0 : i32
    %0 = arith.cmpi eq, %arg1, %c0_i32 : i32
    %1 = arith.extui %0 : i1 to i32
    %c0_i32_0 = arith.constant 0 : i32
    %2 = arith.cmpi ne, %1, %c0_i32_0 : i32
    scf.if %2 {
      %c0_13 = arith.constant 0 : index
      %c0_14 = arith.constant 0 : index
      %c0_15 = arith.constant 0 : index
      %25 = vector.load %arg2[%c0_13, %c0_14, %c0_15] : memref<1x8x128xf32, #tpu.memory_space<vmem>>, vector<1x8x128xf32>
      %c0_16 = arith.constant 0 : index
      %c0_17 = arith.constant 0 : index
      %c0_18 = arith.constant 0 : index
      %26 = vector.load %arg5[%c0_16, %c0_17, %c0_18] : memref<1x8x128xf32, #tpu.memory_space<vmem>>, vector<1x8x128xf32>
      tpu.vector_store %arg5[%c0_16, %c0_17, %c0_18], %25 {strides = array<i32>} : memref<1x8x128xf32, #tpu.memory_space<vmem>>, vector<1x8x128xf32>,
    } else {
    }
    %c0 = arith.constant 0 : index
    %c0_1 = arith.constant 0 : index
    %c0_2 = arith.constant 0 : index
    %3 = vector.load %arg5[%c0, %c0_1, %c0_2] : memref<1x8x128xf32, #tpu.memory_space<vmem>>, vector<1x8x128xf32>
    %4 = arith.index_cast %arg1 : i32 to index
    %c0_3 = arith.constant 0 : index
    %c0_4 = arith.constant 0 : index
    %5 = vector.load %arg3[%4, %c0_3, %c0_4] : memref<2x128x128xf32, #tpu.memory_space<vmem>>, vector<1x128x128xf32>
    %6 = vector.shape_cast %5 : vector<1x128x128xf32> to vector<128x128xf32>
    %7 = arith.index_cast %arg1 : i32 to index
    %c0_5 = arith.constant 0 : index
    %c0_6 = arith.constant 0 : index
    %8 = vector.load %arg4[%7, %c0_5, %c0_6] : memref<2x16x128xf32, #tpu.memory_space<vmem>>, vector<1x16x128xf32>
    %9 = vector.shape_cast %8 : vector<1x16x128xf32> to vector<16x128xf32>
    %10 = vector.shape_cast %3 : vector<1x8x128xf32> to vector<8x128xf32>
    %cst = arith.constant dense<0.000000e+00> : vector<8x128xf32>
    %11 = tpu.matmul %10, %6, %cst {dimension_numbers = #tpu.dot_dimension_numbers<[1], [0], [0], [1], [0, 0, 1, 1], [], []>} : vector<8x128xf32>, vector<128x128xf32>, vector<8x128xf32> -> vector<8x128xf32>
    %12 = vector.extract_strided_slice %11 {offsets = [0, 0], sizes = [8, 16], strides = [1, 1]} : vector<8x128xf32> to vector<8x16xf32>
    %13 = vector.shape_cast %12 : vector<8x16xf32> to vector<1x8x16xf32>
    %14 = vector.extract_strided_slice %11 {offsets = [0, 16], sizes = [8, 16], strides = [1, 1]} : vector<8x128xf32> to vector<8x16xf32>
    %15 = vector.shape_cast %14 : vector<8x16xf32> to vector<1x8x16xf32>
    %16 = vector.extract_strided_slice %11 {offsets = [0, 32], sizes = [8, 16], strides = [1, 1]} : vector<8x128xf32> to vector<8x16xf32>
    %17 = vector.shape_cast %16 : vector<8x16xf32> to vector<1x8x16xf32>
    %cst_7 = arith.constant dense<0.000000e+00> : vector<1x8x8xf32>
    %18 = tpu.matmul %13, %15, %cst_7 {dimension_numbers = #tpu.dot_dimension_numbers<[2], [2], [1], [1], [0, 0, 0, 1, 1, 1], [0], [0]>} : vector<1x8x16xf32>, vector<1x8x16xf32>, vector<1x8x8xf32> -> vector<1x8x8xf32>
    %cst_8 = arith.constant dense<0.000000e+00> : vector<1x8x16xf32>
    %19 = tpu.matmul %18, %17, %cst_8 {dimension_numbers = #tpu.dot_dimension_numbers<[2], [1], [1], [2], [0, 0, 0, 1, 1, 2], [0], [0]>} : vector<1x8x8xf32>, vector<1x8x16xf32>, vector<1x8x16xf32> -> vector<1x8x16xf32>
    %20 = vector.shape_cast %19 : vector<1x8x16xf32> to vector<8x16xf32>
    %cst_9 = arith.constant dense<0.000000e+00> : vector<8x128xf32>
    %21 = tpu.matmul %20, %9, %cst_9 {dimension_numbers = #tpu.dot_dimension_numbers<[1], [0], [0], [1], [0, 0, 1, 1], [], []>} : vector<8x16xf32>, vector<16x128xf32>, vector<8x128xf32> -> vector<8x128xf32>
    %22 = vector.shape_cast %21 : vector<8x128xf32> to vector<1x8x128xf32>
    %23 = arith.addf %3, %22 : vector<1x8x128xf32>
    %c0_10 = arith.constant 0 : index
    %c0_11 = arith.constant 0 : index
    %c0_12 = arith.constant 0 : index
    %24 = vector.load %arg5[%c0_10, %c0_11, %c0_12] : memref<1x8x128xf32, #tpu.memory_space<vmem>>, vector<1x8x128xf32>
    tpu.vector_store %arg5[%c0_10, %c0_11, %c0_12], %23 {strides = array<i32>} : memref<1x8x128xf32, #tpu.memory_space<vmem>>, vector<1x8x128xf32>,
    return
  }
  func.func @transform_0(%arg0: i32, %arg1: i32) -> (i32, i32, i32) {
    %c0_i32 = arith.constant 0 : i32
    %c0_i32_0 = arith.constant 0 : i32
    %c0_i32_1 = arith.constant 0 : i32
    return %arg0, %c0_i32, %c0_i32_0 : i32, i32, i32
  }
  func.func @transform_1(%arg0: i32, %arg1: i32) -> (i32, i32, i32) {
    %c0_i32 = arith.constant 0 : i32
    %c0_i32_0 = arith.constant 0 : i32
    %c0_i32_1 = arith.constant 0 : i32
    %c0_i32_2 = arith.constant 0 : i32
    return %c0_i32, %c0_i32_0, %c0_i32_1 : i32, i32, i32
  }
  func.func @transform_2(%arg0: i32, %arg1: i32) -> (i32, i32, i32) {
    %c0_i32 = arith.constant 0 : i32
    %c0_i32_0 = arith.constant 0 : i32
    %c0_i32_1 = arith.constant 0 : i32
    %c0_i32_2 = arith.constant 0 : i32
    return %c0_i32, %c0_i32_0, %c0_i32_1 : i32, i32, i32
  }
  func.func @transform_3(%arg0: i32, %arg1: i32) -> (i32, i32, i32) {
    %c0_i32 = arith.constant 0 : i32
    %c0_i32_0 = arith.constant 0 : i32
    %c0_i32_1 = arith.constant 0 : i32
    return %arg0, %c0_i32, %c0_i32_0 : i32, i32, i32
  }
}

</mosaic_0001>

<llo_original>
// kernel: lsa_model_forward.1
$region0: #{lsa_model_forward.1}
  #allocation0 [shape = 'u32[]', space=smem, size = 0x4, offset = 0x4, fixed_abs, tag = 'smem constant byte address 0x4 - core index']
  #allocation1 [shape = 'u32[72,128]{1,0:T(1,128)}', space=vmem, size = 0x9000, scoped, tag = 'internal scratch']
  %s0 = inlined_call_operand.vmem [shape: f32[2,8,128], index: 0, kind: input, shape index: {}]
  %s1 = inlined_call_operand.vmem [shape: f32[2,128,128], index: 1, kind: input, shape index: {}]
  %s2 = inlined_call_operand.vmem [shape: f32[2,16,128], index: 2, kind: input, shape index: {}]
  %s3 = inlined_call_operand.hbm [shape: f32[2,8,128], index: 3, kind: output, shape index: {}]
  %s4 = sld [smem:[#allocation0]]
  $region49: #{lsa_model_forward.1} parent=0
    _
  %s6 = ssub.s32 1, %s4
  %s7 = scalar_select 0, %s6, %s4
  $region1: #{lsa_model_forward.1} parent=0
    #allocation2 [shape = 'u8[8192]{0}', space=vmem, size = 0x2000, scoped, tag = 'output window, operand 0']
    #allocation3 [shape = 's32[2]{0}', space=sflag, size = 0x8, scoped, tag = 'scoped memory for lsa_model_forward.1']
    %8 = vsyncpa [#allocation3], 0
    %s9 = scalar_lea.sflag [#allocation3], 1
    %10 = vsyncpa %s9, 0
    loop: start=0, step=1, limit=6
    $region2: #{lsa_model_forward.1} parent=1 // loop_pre_header
      _
    $region3: #{lsa_model_forward.1} parent=1 // loop_header
      %s12 = sphi 0, %s16
      %p13 = scmp.ge.s32.totalorder %s12, 6
      %s19 = sphi 0, %s31
      %s20 = sphi 0, %s27
      %s21 = sphi 0, %s19
      %s22 = sphi 0, %s20
      %s23 = sphi 0, %s21
      %s24 = sphi 0, %s22
      %s34 = sphi 0, %s36
      %s37 = sphi 0, %s34
      %s38 = sphi 0, %s37
      %s54 = sphi 0, %s38
      %s58 = sphi 0, %s58
      %s60 = sphi 0, %s58
      %s61 = sphi 0, %s60
      %s75 = sphi 0, %s61
      %s79 = sphi 0, %s79
      %s81 = sphi 0, %s79
      %s82 = sphi 0, %s81
      %s96 = sphi 0, %s82
      %s102 = sphi 0, %s104
      %s105 = sphi 0, %s102
      %s106 = sphi 0, %s105
      %s122 = sphi 0, %s106
    $region4: #{lsa_model_forward.1} parent=1 // loop_header_branch
      %15 = sbr.rel (%p13) target = $region8
    $region5: #{lsa_model_forward.1} parent=1 // loop_body
      %s17 = ssub.s32 %s12, 1
      %s18 = ssub.s32 %s12, 2
      %s25 = sadd.s32 1, %s20
      %p26 = scmp.ge.s32.totalorder %s25, 2
      %s27 = scalar_select %p26, 0, %s25
      %s28 = sadd.s32 1, %s19
      %s29 = scalar_select %p26, %s28, %s19
      %p30 = scmp.ge.s32.totalorder %s29, 2
      %s31 = scalar_select %p30, 0, %s29
      %s32 = ssub.s32 %s19, %s31
      %p33 = scmp.eq.s32.totalorder %s32, 0
      %s35 = sadd.s32 %s34, 1
      %s36 = scalar_select %p33, %s34, %s35
      %p39 = pneg %p33
      %p40 = scmp.eq.s32.totalorder %s12, 3
      %p41 = por %p39, %p40
      %p42 = scmp.ne.s32.totalorder %s34, %s37
      %p43 = scmp.eq.s32.totalorder %s12, 0
      %p44 = por %p42, %p43
      %p45 = scmp.ne.s32.totalorder %s34, %s37
      %p46 = scmp.eq.s32.totalorder %s17, 3
      %p47 = por %p45, %p46
      %p48 = scmp.ne.s32.totalorder %s37, %s38
      %p49 = scmp.eq.s32.totalorder %s17, 0
      %p50 = por %p48, %p49
      %p51 = scmp.ne.s32.totalorder %s37, %s38
      %p52 = scmp.eq.s32.totalorder %s18, 3
      %p53 = por %p51, %p52
      %p55 = scmp.ne.s32.totalorder %s38, %s54
      %p56 = scmp.eq.s32.totalorder %s18, 0
      %p57 = por %p55, %p56
      %s59 = sadd.s32 %s58, 1
      %p62 = scmp.eq.s32.totalorder %s12, 3
      %p63 = scmp.ne.s32.totalorder %s58, %s60
      %p64 = scmp.eq.s32.totalorder %s12, 0
      %p65 = por %p63, %p64
      %p66 = scmp.ne.s32.totalorder %s58, %s60
      %p67 = scmp.eq.s32.totalorder %s17, 3
      %p68 = por %p66, %p67
      %p69 = scmp.ne.s32.totalorder %s60, %s61
      %p70 = scmp.eq.s32.totalorder %s17, 0
      %p71 = por %p69, %p70
      %p72 = scmp.ne.s32.totalorder %s60, %s61
      %p73 = scmp.eq.s32.totalorder %s18, 3
      %p74 = por %p72, %p73
      %p76 = scmp.ne.s32.totalorder %s61, %s75
      %p77 = scmp.eq.s32.totalorder %s18, 0
      %p78 = por %p76, %p77
      %s80 = sadd.s32 %s79, 1
      %p83 = scmp.eq.s32.totalorder %s12, 3
      %p84 = scmp.ne.s32.totalorder %s79, %s81
      %p85 = scmp.eq.s32.totalorder %s12, 0
      %p86 = por %p84, %p85
      %p87 = scmp.ne.s32.totalorder %s79, %s81
      %p88 = scmp.eq.s32.totalorder %s17, 3
      %p89 = por %p87, %p88
      %p90 = scmp.ne.s32.totalorder %s81, %s82
      %p91 = scmp.eq.s32.totalorder %s17, 0
      %p92 = por %p90, %p91
      %p93 = scmp.ne.s32.totalorder %s81, %s82
      %p94 = scmp.eq.s32.totalorder %s18, 3
      %p95 = por %p93, %p94
      %p97 = scmp.ne.s32.totalorder %s82, %s96
      %p98 = scmp.eq.s32.totalorder %s18, 0
      %p99 = por %p97, %p98
      %s100 = ssub.s32 %s19, %s31
      %p101 = scmp.eq.s32.totalorder %s100, 0
      %s103 = sadd.s32 %s102, 1
      %s104 = scalar_select %p101, %s102, %s103
      %p107 = pneg %p101
      %p108 = scmp.eq.s32.totalorder %s12, 3
      %p109 = por %p107, %p108
      %p110 = scmp.ne.s32.totalorder %s102, %s105
      %p111 = scmp.eq.s32.totalorder %s12, 0
      %p112 = por %p110, %p111
      %p113 = scmp.ne.s32.totalorder %s102, %s105
      %p114 = scmp.eq.s32.totalorder %s17, 3
      %p115 = por %p113, %p114
      %p116 = scmp.ne.s32.totalorder %s105, %s106
      %p117 = scmp.eq.s32.totalorder %s17, 0
      %p118 = por %p116, %p117
      %p119 = scmp.ne.s32.totalorder %s105, %s106
      %p120 = scmp.eq.s32.totalorder %s18, 3
      %p121 = por %p119, %p120
      %p123 = scmp.ne.s32.totalorder %s106, %s122
      %p124 = scmp.eq.s32.totalorder %s18, 0
      %p125 = por %p123, %p124
      %p126 = scmp.le.s32.totalorder 1, %s12
      %p127 = scmp.lt.s32.totalorder %s12, 5
      %p128 = pnand %p126, %p127
      %p129 = pneg %p128
      // Predicated region
      $region9: #{lsa_model_forward.1} parent=5 // pred_check
        _
      $region10: #{lsa_model_forward.1} parent=5 // pred_check_branch
        %131 = sbr.rel (%p128) target = $region12
      $region11: #{lsa_model_forward.1} parent=5 // pred_region
        %s132 = ssub.s32 %s12, 1
        // Predicated region
        $region13: #{lsa_model_forward.1} parent=11 // pred_check
          %p133 = pneg %p71
        $region14: #{lsa_model_forward.1} parent=11 // pred_check_branch
          %135 = sbr.rel (%p133) target = $region16
        $region15: #{lsa_model_forward.1} parent=11 // pred_region
          _
        $region16: #{lsa_model_forward.1} parent=11 // pred_fallthru
          _
        // Predicated region
        $region17: #{lsa_model_forward.1} parent=11 // pred_check
          %p136 = pneg %p92
        $region18: #{lsa_model_forward.1} parent=11 // pred_check_branch
          %138 = sbr.rel (%p136) target = $region20
        $region19: #{lsa_model_forward.1} parent=11 // pred_region
          _
        $region20: #{lsa_model_forward.1} parent=11 // pred_fallthru
          _
      $region12: #{lsa_model_forward.1} parent=5 // pred_fallthru
        _
      %p139 = scmp.lt.s32.totalorder %s12, 4
      // Predicated region
      $region21: #{lsa_model_forward.1} parent=5 // pred_check
        %p140 = pneg %p139
      $region22: #{lsa_model_forward.1} parent=5 // pred_check_branch
        %142 = sbr.rel (%p140) target = $region24
      $region23: #{lsa_model_forward.1} parent=5 // pred_region
        // Predicated region
        $region25: #{lsa_model_forward.1} parent=23 // pred_check
          %p143 = pneg %p44
        $region26: #{lsa_model_forward.1} parent=23 // pred_check_branch
          %145 = sbr.rel (%p143) target = $region28
        $region27: #{lsa_model_forward.1} parent=23 // pred_region
          %p146 = scmp.lt.s32.totalorder %s19, 1
          %s147 = scalar_select %p146, %s19, 1
          %s148 = smul.addr %s147, 8
          %s149 = scalar_lea.vmem %s0, %s148
        $region28: #{lsa_model_forward.1} parent=23 // pred_fallthru
          _
      $region24: #{lsa_model_forward.1} parent=5 // pred_fallthru
        _
      %p150 = scmp.le.s32.totalorder 1, %s12
      %p151 = scmp.lt.s32.totalorder %s12, 5
      %p152 = pnand %p150, %p151
      %p153 = pneg %p152
      // Predicated region
      $region29: #{lsa_model_forward.1} parent=5 // pred_check
        _
      $region30: #{lsa_model_forward.1} parent=5 // pred_check_branch
        %155 = sbr.rel (%p152) target = $region32
      $region31: #{lsa_model_forward.1} parent=5 // pred_region
        %s156 = ssub.s32 %s12, 1
        %p157 = scmp.lt.s32.totalorder %s21, 1
        %s158 = scalar_select %p157, %s21, 1
        %s159 = smul.addr %s158, 8
        %s160 = scalar_lea.vmem %s0, %s159
        %p161 = pneg %p50
        %p162 = pneg %p47
        %p163 = pneg %p71
        %p164 = pneg %p68
        %p165 = pneg %p92
        %p166 = pneg %p89
        %p167 = pneg %p118
        %p168 = pneg %p115
        %s169 = sand.u32 %s105, 1
        %s170 = scalar_lea.sflag [#allocation3], %s169
        %s171 = sand.u32 %s105, 1
        %s172 = smul.addr %s171, 8
        %s173 = scalar_lea.vmem [#allocation2], %s172
        %p174 = scmp.lt.s32.totalorder %s21, 1
        %s175 = scalar_select %p174, %s21, 1
        %s176 = smul.addr %s175, 8
        %s177 = scalar_lea.vmem %s0, %s176
        %p178 = scmp.eq.s32.totalorder %s22, 0
        // Predicated region
        $region33: #{lsa_model_forward.1} parent=31 // pred_check
          %p179 = pneg %p178
        $region34: #{lsa_model_forward.1} parent=31 // pred_check_branch
          %181 = sbr.rel (%p179) target = $region36
        $region35: #{lsa_model_forward.1} parent=31 // pred_region
          %v182 = vld [vmem:[%s177] sm:$0xff]
          %183 = vst [vmem:[%s173] sm:$0xff] %v182
        $region36: #{lsa_model_forward.1} parent=31 // pred_fallthru
          _
        %v184 = vld [vmem:[%s173] sm:$0xff]
        %s185 = smul.u32 %s22, 128
        %s186 = scalar_lea.vmem %s1, %s185
        %v187 = vld [vmem:[%s186] sm:$0xff]
        %v188 = vld [vmem:[%s186 + $0x8] sm:$0xff]
        %v189 = vld [vmem:[%s186 + $0x10] sm:$0xff]
        %v190 = vld [vmem:[%s186 + $0x18] sm:$0xff]
        %v191 = vld [vmem:[%s186 + $0x20] sm:$0xff]
        %v192 = vld [vmem:[%s186 + $0x28] sm:$0xff]
        %v193 = vld [vmem:[%s186 + $0x30] sm:$0xff]
        %v194 = vld [vmem:[%s186 + $0x38] sm:$0xff]
        %v195 = vld [vmem:[%s186 + $0x40] sm:$0xff]
        %v196 = vld [vmem:[%s186 + $0x48] sm:$0xff]
        %v197 = vld [vmem:[%s186 + $0x50] sm:$0xff]
        %v198 = vld [vmem:[%s186 + $0x58] sm:$0xff]
        %v199 = vld [vmem:[%s186 + $0x60] sm:$0xff]
        %v200 = vld [vmem:[%s186 + $0x68] sm:$0xff]
        %v201 = vld [vmem:[%s186 + $0x70] sm:$0xff]
        %v202 = vld [vmem:[%s186 + $0x78] sm:$0xff]
        %s203 = smul.u32 %s22, 16
        %s204 = scalar_lea.vmem %s2, %s203
        %v205 = vld [vmem:[%s204] sm:$0xff]
        %v206 = vld [vmem:[%s204 + $0x8] sm:$0xff]
        %207 = vmatpush.msra.mxu0 %v202
        %208 = vmatpush.msra.mxu0 %v201
        %209 = vmatpush.msra.mxu0 %v200
        %210 = vmatpush.msra.mxu0 %v199
        %211 = vmatpush.msra.mxu0 %v198
        %212 = vmatpush.msra.mxu0 %v197
        %213 = vmatpush.msra.mxu0 %v196
        %214 = vmatpush.msra.mxu0 %v195
        %215 = vmatpush.msra.mxu0 %v194
        %216 = vmatpush.msra.mxu0 %v193
        %217 = vmatpush.msra.mxu0 %v192
        %218 = vmatpush.msra.mxu0 %v191
        %219 = vmatpush.msra.mxu0 %v190
        %220 = vmatpush.msra.mxu0 %v189
        %221 = vmatpush.msra.mxu0 %v188
        %222 = vmatpush.msra.mxu0 %v187
        %223 = vmatmul.f32.gmra.mxu0 %v184
        %v224 = vpop.f32.mrf.mxu0
        %v225 = vadd.f32 0.0, %v224
        %226 = vdwg.mxu0
        %228 = vrot.lane.b32.xlu0 %v225, 112
        %v229 = vpop.permute.xlu0 %228
        %vm230 = vcmask 130048
        %v231 = vsel %vm230, %v225, 0
        %v233 = vsel %vm230, %v229, 0
        %235 = vmatpush.xpose.msra.mxu0 0.0
        %236 = vmatpush.xpose.msra.mxu0 0.0
        %237 = vmatpush.xpose.msra.mxu0 0.0
        %238 = vmatpush.xpose.msra.mxu0 0.0
        %239 = vmatpush.xpose.msra.mxu0 0.0
        %240 = vmatpush.xpose.msra.mxu0 0.0
        %241 = vmatpush.xpose.msra.mxu0 0.0
        %242 = vmatpush.xpose.msra.mxu0 0.0
        %243 = vmatpush.xpose.msra.mxu0 0.0
        %244 = vmatpush.xpose.msra.mxu0 0.0
        %245 = vmatpush.xpose.msra.mxu0 0.0
        %246 = vmatpush.xpose.msra.mxu0 0.0
        %247 = vmatpush.xpose.msra.mxu0 0.0
        %248 = vmatpush.xpose.msra.mxu0 0.0
        %249 = vmatpush.xpose.msra.mxu0 0.0
        %250 = vmatpush.xpose.msra.mxu0 %v233
        %251 = vmatmul.f32.gmra.mxu0 %v231
        %v252 = vpop.f32.mrf.mxu0
        %v253 = vadd.f32 0.0, %v252
        %254 = vdwg.mxu0
        %255 = vrot.lane.b32.xlu0 %v225, 96
        %v256 = vpop.permute.xlu0 %255
        %vm258 = vcmask 64512
        %v260 = vsel %vm258, %v253, 0
        %262 = vmatpush.msra.mxu0 0.0
        %263 = vmatpush.msra.mxu0 0.0
        %264 = vmatpush.msra.mxu0 0.0
        %265 = vmatpush.msra.mxu0 0.0
        %266 = vmatpush.msra.mxu0 0.0
        %267 = vmatpush.msra.mxu0 0.0
        %268 = vmatpush.msra.mxu0 0.0
        %269 = vmatpush.msra.mxu0 0.0
        %270 = vmatpush.msra.mxu0 0.0
        %271 = vmatpush.msra.mxu0 0.0
        %272 = vmatpush.msra.mxu0 0.0
        %273 = vmatpush.msra.mxu0 0.0
        %274 = vmatpush.msra.mxu0 0.0
        %275 = vmatpush.msra.mxu0 0.0
        %276 = vmatpush.msra.mxu0 0.0
        %277 = vmatpush.msra.mxu0 %v256
        %278 = vmatmul.f32.gmra.mxu0 %v260
        %v279 = vpop.f32.mrf.mxu0
        %v280 = vadd.f32 0.0, %v279
        %281 = vdwg.mxu0
        %v283 = vsel %vm230, %v280, 0
        %285 = vmatpush.msra.mxu0 0.0
        %286 = vmatpush.msra.mxu0 0.0
        %287 = vmatpush.msra.mxu0 0.0
        %288 = vmatpush.msra.mxu0 0.0
        %289 = vmatpush.msra.mxu0 0.0
        %290 = vmatpush.msra.mxu0 0.0
        %291 = vmatpush.msra.mxu0 0.0
        %292 = vmatpush.msra.mxu0 0.0
        %293 = vmatpush.msra.mxu0 0.0
        %294 = vmatpush.msra.mxu0 0.0
        %295 = vmatpush.msra.mxu0 0.0
        %296 = vmatpush.msra.mxu0 0.0
        %297 = vmatpush.msra.mxu0 0.0
        %298 = vmatpush.msra.mxu0 0.0
        %299 = vmatpush.msra.mxu0 %v206
        %300 = vmatpush.msra.mxu0 %v205
        %301 = vmatmul.f32.gmra.mxu0 %v283
        %v302 = vpop.f32.mrf.mxu0
        %v303 = vadd.f32 0.0, %v302
        %304 = vdwg.mxu0
        %v305 = vadd.f32 %v184, %v303
        %306 = vst [vmem:[%s173] sm:$0xff] %v305
        %s307 = sand.u32 %s105, 1
        %s308 = scalar_lea.sflag [#allocation3], %s307
        %s309 = sand.u32 %s105, 1
        %s310 = smul.addr %s309, 8
        %s311 = scalar_lea.vmem [#allocation2], %s310
        // Predicated region
        $region37: #{lsa_model_forward.1} parent=31 // pred_check
          %p312 = pneg %p115
        $region38: #{lsa_model_forward.1} parent=31 // pred_check_branch
          %314 = sbr.rel (%p312) target = $region40
        $region39: #{lsa_model_forward.1} parent=31 // pred_region
          %316 = vsyncadd %s308, 0
          %s317 = smul.addr %s21, 8
          %s318 = scalar_lea.hbm %s3, %s317
          %s320 = sshll.u32 %s311, 4
          %s321 = int_to_ptr.vmem [resolvable:$true] %s320
          %s322 = sshll.u32 %s318, 4
          %s323 = int_to_ptr.hbm [resolvable:$true] %s322
          %325 = dma.vmem_to_hbm [thread:$0]  %s321, 128, %s323, %s308
        $region40: #{lsa_model_forward.1} parent=31 // pred_fallthru
          _
      $region32: #{lsa_model_forward.1} parent=5 // pred_fallthru
        _
      %p326 = scmp.le.s32.totalorder 2, %s12
      // Predicated region
      $region41: #{lsa_model_forward.1} parent=5 // pred_check
        %p327 = pneg %p326
      $region42: #{lsa_model_forward.1} parent=5 // pred_check_branch
        %329 = sbr.rel (%p327) target = $region44
      $region43: #{lsa_model_forward.1} parent=5 // pred_region
        %s330 = ssub.s32 %s12, 2
        // Predicated region
        $region45: #{lsa_model_forward.1} parent=43 // pred_check
          %p331 = pneg %p121
        $region46: #{lsa_model_forward.1} parent=43 // pred_check_branch
          %333 = sbr.rel (%p331) target = $region48
        $region47: #{lsa_model_forward.1} parent=43 // pred_region
          %s334 = sand.u32 %s106, 1
          %s335 = scalar_lea.sflag [#allocation3], %s334
          %s336 = sand.u32 %s106, 1
          %s337 = smul.addr %s336, 8
          %s338 = scalar_lea.vmem [#allocation2], %s337
          %340 = dma.done %s335, 128
        $region48: #{lsa_model_forward.1} parent=43 // pred_fallthru
          _
      $region44: #{lsa_model_forward.1} parent=5 // pred_fallthru
        _
    $region6: #{lsa_model_forward.1} parent=1 // loop_footer
      %s16 = sadd.s32 1, %s12
    $region7: #{lsa_model_forward.1} parent=1 // loop_footer_branch
      %11 = sbr.rel target = $region3
    $region8: #{lsa_model_forward.1} parent=1 // loop_exit
      _
    %341 = vsyncpa [#allocation3], 1
    %s342 = scalar_lea.sflag [#allocation3], 1
    %343 = vsyncpa %s342, 1

</llo_original>
